<compile_context>
chip_gen: v6e
topology: v6e:2x2x1
jax: 0.10.0
libtpu: 0.0.40
codegen_flags: <defaults>
</compile_context>

<pallas_src>
import functools
import numpy as np
import jax
import jax.numpy as jnp
from jax import lax
from jax.experimental import pallas as pl
from jax.experimental.pallas import tpu as pltpu


# ----------------------------------------------------------------------------
# Parameter construction (glue, mirrors RingModule.__init__ / generate_*_diff)
# ----------------------------------------------------------------------------
def generate_w_matrix_diff(nNeurons, nBumps, length, wWeight, wShift, wScaling):
    length2 = int(2 * np.ceil(length))
    positions = np.arange(-length2, length2 + 1)
    if wScaling:
        strength = wWeight * nBumps / nNeurons
    else:
        strength = wWeight
    values = strength * (np.cos(np.pi * positions / length) - 1.0) / 2.0
    values = values * (np.abs(positions) < 2 * length)
    wUnshifted = np.zeros(nNeurons, dtype=np.float64)
    for position, w in zip(positions, values):
        wUnshifted[position % nNeurons] += w
    wQuadrant = np.vstack([np.roll(wUnshifted, i) for i in range(nNeurons)])
    wMatrix = np.hstack((np.roll(wQuadrant, -wShift, 0), np.roll(wQuadrant, wShift, 0)))
    wMatrix = np.vstack((wMatrix, wMatrix))
    return wMatrix


def generate_alpha_matrix_diff(neurons, length, alpha, wWeight, wShift=2, wScaling=True):
    cutoff = int((1 - alpha) * length)
    wMatrix = generate_w_matrix_diff(neurons + cutoff, 1, length, wWeight, wShift, wScaling)
    real_w = np.zeros((neurons * 2, neurons * 2), dtype=np.float64)
    end = 2 * neurons + cutoff
    real_w[:neurons, :neurons] = wMatrix[:neurons, :neurons]
    real_w[neurons:, neurons:] = wMatrix[neurons + cutoff:end, neurons + cutoff:end]
    real_w[:neurons, neurons:] = wMatrix[:neurons, neurons + cutoff:end]
    real_w[neurons:, :neurons] = wMatrix[neurons + cutoff:end, :neurons]
    return real_w.astype(np.float32)


class RingModuleParams:
    """Deterministic parameter setup mirroring RingModule.__init__."""

    def __init__(self, input_size, nNeurons=64, nBumps=1, length=40, dt=0.5, tau=10.0,
                 wWeight=8.0, wShift=2, wScaling=True, gammaMultiplier=1.0,
                 pulseMag=1.0, pulsePosition=50):
        self.input_size = input_size
        self.nNeurons = nNeurons
        self.hidden_size = 2 * nNeurons
        self.nBumps = nBumps
        self.alpha = dt / tau
        self.pulseMag = pulseMag
        self.pulsePosition = pulsePosition

        self.wAttractor = jnp.asarray(
            generate_alpha_matrix_diff(nNeurons, length, 1.0, wWeight, wShift, wScaling))
        # input_to_vel: Linear(input_size, 1, bias=False), weights initialized to ones.
        self.w_in = jnp.ones((input_size,), dtype=jnp.float32)
        # vel_to_ring: Linear(1, hidden_size), weight = gamma, bias = ones (both frozen).
        gamma = gammaMultiplier * np.concatenate(
            (-np.ones(nNeurons), np.ones(nNeurons))).astype(np.float32)
        self.gamma = jnp.asarray(gamma)
        self.bias = jnp.ones((self.hidden_size,), dtype=jnp.float32)

    def pulse_hidden(self):
        """Pre-settling hidden state from init_hidden (0.005 background + pulses)."""
        bump_period = self.nNeurons // self.nBumps
        pulse_inds = bump_period * np.arange(self.nBumps)
        pulse_inds = np.concatenate((pulse_inds, self.nNeurons + pulse_inds))
        pulse_inds = pulse_inds + int(self.pulsePosition % bump_period)
        h = 0.005 * np.ones(self.hidden_size, dtype=np.float32)
        h[pulse_inds] += self.pulseMag
        return jnp.asarray(h)


# ----------------------------------------------------------------------------
# Pallas kernel: one time-block of the recurrence per grid step
# ----------------------------------------------------------------------------
_GROUP = 8  # rows per full (8, H) activation tile store / static unroll factor


def _ring_kernel(x_ref, h0_ref, w_in_ref, gamma_ref, bias_ref, w_ref,
                 acts_ref, h_scr, i2h_scr, *, alpha, t_blk):
    # h_scr: (1, H) VMEM scratch carrying the hidden state across grid steps (time blocks).
    @pl.when(pl.program_id(0) == 0)
    def _init():
        h_scr[...] = h0_ref[...]

    # --- Hoisted input projection for this time block (vectorized, off the serial path) ---
    # vel_t = sum_j x[t, j] * w_in[j];  i2h_t = alpha * (gamma * vel_t + bias)
    # (alpha is pre-folded here and into W below: alpha*relu(z) == relu(alpha*z) for alpha > 0.)
    vel = jnp.sum(x_ref[...] * w_in_ref[...], axis=-1, keepdims=True)      # (t_blk, 1)
    i2h_scr[...] = alpha * (vel * gamma_ref[...] + bias_ref[...])          # (t_blk, H)

    # Loop-invariant weight matrix (pre-scaled by alpha) held in vregs for the whole block.
    w = alpha * w_ref[...]                                                 # (H, H)
    one_m_alpha = 1.0 - alpha

    def group_body(g, h):
        base = pl.multiple_of(g * _GROUP, _GROUP)
        i2h_grp = i2h_scr[pl.ds(base, _GROUP), :]                          # (8, H) single load
        rows = []
        for s in range(_GROUP):                                            # bounded unroll of 8
            h2h = jnp.dot(h, w, preferred_element_type=jnp.float32)        # (1, H) MXU matvec
            # critical path: dot -> add -> max -> add ; the decay mul runs in parallel.
            h = one_m_alpha * h + jnp.maximum(i2h_grp[s:s + 1, :] + h2h, 0.0)
            rows.append(h)
        # Full unmasked (8, H) tile store of 8 consecutive activations.
        acts_ref[pl.ds(base, _GROUP), :] = jnp.concatenate(rows, axis=0)
        return h

    h_out = lax.fori_loop(0, t_blk // _GROUP, group_body, h_scr[...])
    h_scr[...] = h_out


def ring_forward(x, hidden, params: RingModuleParams, t_blk=256):
    """Equivalent of RingModule.forward(input, hidden) -> (hidden_acts, hidden)."""
    T, In = x.shape
    H = params.hidden_size

    # Time-block size: multiple of 8, no larger than the (padded) sequence length.
    t_blk = max(_GROUP, (min(int(t_blk), pl.cdiv(T, _GROUP) * _GROUP) // _GROUP) * _GROUP)
    T_pad = pl.cdiv(T, t_blk) * t_blk
    num_blocks = T_pad // t_blk

    x_f = x.astype(jnp.float32)
    if T_pad != T:
        x_f = jnp.pad(x_f, ((0, T_pad - T), (0, 0)))

    kernel = functools.partial(_ring_kernel, alpha=float(params.alpha), t_blk=t_blk)
    full = lambda i: (0, 0)

    acts_full = pl.pallas_call(
        kernel,
        out_shape=jax.ShapeDtypeStruct((T_pad, H), jnp.float32),
        grid_spec=pltpu.PrefetchScalarGridSpec(
            num_scalar_prefetch=0,
            grid=(num_blocks,),
            in_specs=[
                pl.BlockSpec((t_blk, In), lambda i: (i, 0)),   # x time block
                pl.BlockSpec((1, H), full),                    # h0
                pl.BlockSpec((1, In), full),                   # w_in
                pl.BlockSpec((1, H), full),                    # gamma
                pl.BlockSpec((1, H), full),                    # bias
                pl.BlockSpec((H, H), full),                    # wAttractor
            ],
            out_specs=pl.BlockSpec((t_blk, H), lambda i: (i, 0)),
            scratch_shapes=[
                pltpu.VMEM((1, H), jnp.float32),       # hidden state carried across blocks
                pltpu.VMEM((t_blk, H), jnp.float32),   # hoisted alpha*i2h for current block
            ]),
        compiler_params=pltpu.CompilerParams(
            dimension_semantics=("arbitrary",),
            vmem_limit_bytes=32 * 1024 * 1024),
    )(x_f,
      hidden.reshape(1, H).astype(jnp.float32),
      params.w_in.reshape(1, In),
      params.gamma.reshape(1, H),
      params.bias.reshape(1, H),
      params.wAttractor)

    acts = acts_full[:T]
    h_fin = acts_full[T - 1]     # final hidden == last valid activation row
    return acts, h_fin


# ----------------------------------------------------------------------------
# Pure-JAX reference (for correctness check)
# ----------------------------------------------------------------------------
def ring_forward_ref(x, hidden, params: RingModuleParams):
    def recurrence(h, x_t):
        vel = jnp.sum(x_t * params.w_in)
        i2h = params.gamma * vel + params.bias
        h2h = h @ params.wAttractor
        h_new = (1.0 - params.alpha) * h + params.alpha * jnp.maximum(i2h + h2h, 0.0)
        return h_new, h_new

    h_fin, acts = lax.scan(recurrence, hidden, x)
    return acts, h_fin


# TODO(synk): init_hidden()'s data-dependent settling while-loop (run dynamics until the bump
# stabilizes at pulsePosition) is not ported into the kernel; the example passes the
# pulse-initialized hidden state explicitly, which forward() accepts.
# TODO(synk): the module's forward is single-sequence; with a batch dimension the per-step LHS
# should be stacked to (B, H) and sharded across TensorCores, which this kernel does not do.

if __name__ == "__main__":
    T = 20
    input_size = 4
    params = RingModuleParams(input_size=input_size, nNeurons=64)

    key = jax.random.PRNGKey(0)
    x = 0.1 * jax.random.normal(key, (T, input_size), dtype=jnp.float32)
    hidden0 = params.pulse_hidden()

    # Small t_blk to exercise the time-blocked grid, scratch hidden carry, and tail padding.
    acts, h_fin = ring_forward(x, hidden0, params, t_blk=8)
    acts = jax.block_until_ready(acts)
    h_fin = jax.block_until_ready(h_fin)

    acts_ref, h_fin_ref = ring_forward_ref(x, hidden0, params)
    assert acts.shape == (T, params.hidden_size)
    assert h_fin.shape == (params.hidden_size,)
    np.testing.assert_allclose(np.asarray(acts), np.asarray(acts_ref), rtol=1e-4, atol=1e-4)
    np.testing.assert_allclose(np.asarray(h_fin), np.asarray(h_fin_ref), rtol=1e-4, atol=1e-4)

    print("KERNEL_OK")
</pallas_src>

<mosaic_0001>
module attributes {stable_mosaic.version = 11 : i64} {
  func.func @_ring_kernel(%arg0: i32, %arg1: memref<8x4xf32, #tpu.memory_space<vmem>>, %arg2: memref<1x128xf32, #tpu.memory_space<vmem>>, %arg3: memref<1x4xf32, #tpu.memory_space<vmem>>, %arg4: memref<1x128xf32, #tpu.memory_space<vmem>>, %arg5: memref<1x128xf32, #tpu.memory_space<vmem>>, %arg6: memref<128x128xf32, #tpu.memory_space<vmem>>, %arg7: memref<8x128xf32, #tpu.memory_space<vmem>>, %arg8: memref<1x128xf32, #tpu.memory_space<vmem>>, %arg9: memref<8x128xf32, #tpu.memory_space<vmem>>) attributes {dimension_semantics = [#tpu.dimension_semantics<arbitrary>], iteration_bounds = array<i64: 3>, scalar_prefetch = 0 : i64, scratch_operands = 2 : i64, tpu.core_type = #tpu.core_type<tc>, window_params = [{transform_indices = @transform_0, window_bounds = array<i64: 8, 4>}, {pipeline_mode = #tpu.pipeline_mode<synchronous>, transform_indices = @transform_1, window_bounds = array<i64: 1, 128>}, {pipeline_mode = #tpu.pipeline_mode<synchronous>, transform_indices = @transform_2, window_bounds = array<i64: 1, 4>}, {pipeline_mode = #tpu.pipeline_mode<synchronous>, transform_indices = @transform_3, window_bounds = array<i64: 1, 128>}, {pipeline_mode = #tpu.pipeline_mode<synchronous>, transform_indices = @transform_4, window_bounds = array<i64: 1, 128>}, {pipeline_mode = #tpu.pipeline_mode<synchronous>, transform_indices = @transform_5, window_bounds = array<i64: 128, 128>}, {transform_indices = @transform_6, window_bounds = array<i64: 8, 128>}]} {
    %c0_i32 = arith.constant 0 : i32
    %0 = arith.cmpi eq, %arg0, %c0_i32 : i32
    %1 = arith.extui %0 : i1 to i32
    %c0_i32_0 = arith.constant 0 : i32
    %2 = arith.cmpi ne, %1, %c0_i32_0 : i32
    scf.if %2 {
      %c0_45 = arith.constant 0 : index
      %c0_46 = arith.constant 0 : index
      %95 = vector.load %arg2[%c0_45, %c0_46] : memref<1x128xf32, #tpu.memory_space<vmem>>, vector<1x128xf32>
      %c0_47 = arith.constant 0 : index
      %c0_48 = arith.constant 0 : index
      %96 = vector.load %arg8[%c0_47, %c0_48] : memref<1x128xf32, #tpu.memory_space<vmem>>, vector<1x128xf32>
      tpu.vector_store %arg8[%c0_47, %c0_48], %95 {strides = array<i32>} : memref<1x128xf32, #tpu.memory_space<vmem>>, vector<1x128xf32>,
    } else {
    }
    %c0 = arith.constant 0 : index
    %c0_1 = arith.constant 0 : index
    %3 = vector.load %arg1[%c0, %c0_1] : memref<8x4xf32, #tpu.memory_space<vmem>>, vector<8x4xf32>
    %c0_2 = arith.constant 0 : index
    %c0_3 = arith.constant 0 : index
    %4 = vector.load %arg3[%c0_2, %c0_3] : memref<1x4xf32, #tpu.memory_space<vmem>>, vector<1x4xf32>
    %5 = vector.broadcast %4 : vector<1x4xf32> to vector<8x4xf32>
    %6 = arith.mulf %3, %5 : vector<8x4xf32>
    %cst = arith.constant dense<0.000000e+00> : vector<8xf32>
    %7 = vector.multi_reduction <add>, %6, %cst [1] : vector<8x4xf32> to vector<8xf32>
    %8 = vector.shape_cast %7 : vector<8xf32> to vector<8x1xf32>
    %c0_4 = arith.constant 0 : index
    %c0_5 = arith.constant 0 : index
    %9 = vector.load %arg4[%c0_4, %c0_5] : memref<1x128xf32, #tpu.memory_space<vmem>>, vector<1x128xf32>
    %10 = vector.broadcast %8 : vector<8x1xf32> to vector<8x128xf32>
    %11 = vector.broadcast %9 : vector<1x128xf32> to vector<8x128xf32>
    %12 = arith.mulf %10, %11 : vector<8x128xf32>
    %c0_6 = arith.constant 0 : index
    %c0_7 = arith.constant 0 : index
    %13 = vector.load %arg5[%c0_6, %c0_7] : memref<1x128xf32, #tpu.memory_space<vmem>>, vector<1x128xf32>
    %14 = vector.broadcast %13 : vector<1x128xf32> to vector<8x128xf32>
    %15 = arith.addf %12, %14 : vector<8x128xf32>
    %cst_8 = arith.constant 5.000000e-02 : f32
    %16 = vector.broadcast %cst_8 : f32 to vector<8x128xf32>
    %17 = arith.mulf %16, %15 : vector<8x128xf32>
    %c0_9 = arith.constant 0 : index
    %c0_10 = arith.constant 0 : index
    %18 = vector.load %arg9[%c0_9, %c0_10] : memref<8x128xf32, #tpu.memory_space<vmem>>, vector<8x128xf32>
    tpu.vector_store %arg9[%c0_9, %c0_10], %17 {strides = array<i32>} : memref<8x128xf32, #tpu.memory_space<vmem>>, vector<8x128xf32>,
    %c0_11 = arith.constant 0 : index
    %c0_12 = arith.constant 0 : index
    %19 = vector.load %arg6[%c0_11, %c0_12] : memref<128x128xf32, #tpu.memory_space<vmem>>, vector<128x128xf32>
    %cst_13 = arith.constant 5.000000e-02 : f32
    %20 = vector.broadcast %cst_13 : f32 to vector<128x128xf32>
    %21 = arith.mulf %20, %19 : vector<128x128xf32>
    %c0_14 = arith.constant 0 : index
    %c0_15 = arith.constant 0 : index
    %22 = vector.load %arg8[%c0_14, %c0_15] : memref<1x128xf32, #tpu.memory_space<vmem>>, vector<1x128xf32>
    %c0_i32_16 = arith.constant 0 : i32
    %c8_i32 = arith.constant 8 : i32
    %23 = arith.muli %c0_i32_16, %c8_i32 : i32
    %24 = tpu.assume_multiple %23, 8 : i32
    %25 = arith.index_cast %24 : i32 to index
    %c0_17 = arith.constant 0 : index
    %26 = vector.load %arg9[%25, %c0_17] : memref<8x128xf32, #tpu.memory_space<vmem>>, vector<8x128xf32>
    %cst_18 = arith.constant dense<0.000000e+00> : vector<1x128xf32>
    %27 = tpu.matmul %22, %21, %cst_18 {dimension_numbers = #tpu.dot_dimension_numbers<[1], [0], [0], [1], [0, 0, 1, 1], [], []>} : vector<1x128xf32>, vector<128x128xf32>, vector<1x128xf32> -> vector<1x128xf32>
    %cst_19 = arith.constant 0.949999988 : f32
    %28 = vector.broadcast %cst_19 : f32 to vector<1x128xf32>
    %29 = arith.mulf %28, %22 : vector<1x128xf32>
    %30 = vector.extract_strided_slice %26 {offsets = [0, 0], sizes = [1, 128], strides = [1, 1]} : vector<8x128xf32> to vector<1x128xf32>
    %31 = arith.addf %30, %27 : vector<1x128xf32>
    %cst_20 = arith.constant 0.000000e+00 : f32
    %32 = vector.broadcast %cst_20 : f32 to vector<1x128xf32>
    %33 = arith.maximumf %31, %32 : vector<1x128xf32>
    %34 = arith.addf %29, %33 : vector<1x128xf32>
    %cst_21 = arith.constant dense<0.000000e+00> : vector<1x128xf32>
    %35 = tpu.matmul %34, %21, %cst_21 {dimension_numbers = #tpu.dot_dimension_numbers<[1], [0], [0], [1], [0, 0, 1, 1], [], []>} : vector<1x128xf32>, vector<128x128xf32>, vector<1x128xf32> -> vector<1x128xf32>
    %cst_22 = arith.constant 0.949999988 : f32
    %36 = vector.broadcast %cst_22 : f32 to vector<1x128xf32>
    %37 = arith.mulf %36, %34 : vector<1x128xf32>
    %38 = vector.extract_strided_slice %26 {offsets = [1, 0], sizes = [1, 128], strides = [1, 1]} : vector<8x128xf32> to vector<1x128xf32>
    %39 = arith.addf %38, %35 : vector<1x128xf32>
    %cst_23 = arith.constant 0.000000e+00 : f32
    %40 = vector.broadcast %cst_23 : f32 to vector<1x128xf32>
    %41 = arith.maximumf %39, %40 : vector<1x128xf32>
    %42 = arith.addf %37, %41 : vector<1x128xf32>
    %cst_24 = arith.constant dense<0.000000e+00> : vector<1x128xf32>
    %43 = tpu.matmul %42, %21, %cst_24 {dimension_numbers = #tpu.dot_dimension_numbers<[1], [0], [0], [1], [0, 0, 1, 1], [], []>} : vector<1x128xf32>, vector<128x128xf32>, vector<1x128xf32> -> vector<1x128xf32>
    %cst_25 = arith.constant 0.949999988 : f32
    %44 = vector.broadcast %cst_25 : f32 to vector<1x128xf32>
    %45 = arith.mulf %44, %42 : vector<1x128xf32>
    %46 = vector.extract_strided_slice %26 {offsets = [2, 0], sizes = [1, 128], strides = [1, 1]} : vector<8x128xf32> to vector<1x128xf32>
    %47 = arith.addf %46, %43 : vector<1x128xf32>
    %cst_26 = arith.constant 0.000000e+00 : f32
    %48 = vector.broadcast %cst_26 : f32 to vector<1x128xf32>
    %49 = arith.maximumf %47, %48 : vector<1x128xf32>
    %50 = arith.addf %45, %49 : vector<1x128xf32>
    %cst_27 = arith.constant dense<0.000000e+00> : vector<1x128xf32>
    %51 = tpu.matmul %50, %21, %cst_27 {dimension_numbers = #tpu.dot_dimension_numbers<[1], [0], [0], [1], [0, 0, 1, 1], [], []>} : vector<1x128xf32>, vector<128x128xf32>, vector<1x128xf32> -> vector<1x128xf32>
    %cst_28 = arith.constant 0.949999988 : f32
    %52 = vector.broadcast %cst_28 : f32 to vector<1x128xf32>
    %53 = arith.mulf %52, %50 : vector<1x128xf32>
    %54 = vector.extract_strided_slice %26 {offsets = [3, 0], sizes = [1, 128], strides = [1, 1]} : vector<8x128xf32> to vector<1x128xf32>
    %55 = arith.addf %54, %51 : vector<1x128xf32>
    %cst_29 = arith.constant 0.000000e+00 : f32
    %56 = vector.broadcast %cst_29 : f32 to vector<1x128xf32>
    %57 = arith.maximumf %55, %56 : vector<1x128xf32>
    %58 = arith.addf %53, %57 : vector<1x128xf32>
    %cst_30 = arith.constant dense<0.000000e+00> : vector<1x128xf32>
    %59 = tpu.matmul %58, %21, %cst_30 {dimension_numbers = #tpu.dot_dimension_numbers<[1], [0], [0], [1], [0, 0, 1, 1], [], []>} : vector<1x128xf32>, vector<128x128xf32>, vector<1x128xf32> -> vector<1x128xf32>
    %cst_31 = arith.constant 0.949999988 : f32
    %60 = vector.broadcast %cst_31 : f32 to vector<1x128xf32>
    %61 = arith.mulf %60, %58 : vector<1x128xf32>
    %62 = vector.extract_strided_slice %26 {offsets = [4, 0], sizes = [1, 128], strides = [1, 1]} : vector<8x128xf32> to vector<1x128xf32>
    %63 = arith.addf %62, %59 : vector<1x128xf32>
    %cst_32 = arith.constant 0.000000e+00 : f32
    %64 = vector.broadcast %cst_32 : f32 to vector<1x128xf32>
    %65 = arith.maximumf %63, %64 : vector<1x128xf32>
    %66 = arith.addf %61, %65 : vector<1x128xf32>
    %cst_33 = arith.constant dense<0.000000e+00> : vector<1x128xf32>
    %67 = tpu.matmul %66, %21, %cst_33 {dimension_numbers = #tpu.dot_dimension_numbers<[1], [0], [0], [1], [0, 0, 1, 1], [], []>} : vector<1x128xf32>, vector<128x128xf32>, vector<1x128xf32> -> vector<1x128xf32>
    %cst_34 = arith.constant 0.949999988 : f32
    %68 = vector.broadcast %cst_34 : f32 to vector<1x128xf32>
    %69 = arith.mulf %68, %66 : vector<1x128xf32>
    %70 = vector.extract_strided_slice %26 {offsets = [5, 0], sizes = [1, 128], strides = [1, 1]} : vector<8x128xf32> to vector<1x128xf32>
    %71 = arith.addf %70, %67 : vector<1x128xf32>
    %cst_35 = arith.constant 0.000000e+00 : f32
    %72 = vector.broadcast %cst_35 : f32 to vector<1x128xf32>
    %73 = arith.maximumf %71, %72 : vector<1x128xf32>
    %74 = arith.addf %69, %73 : vector<1x128xf32>
    %cst_36 = arith.constant dense<0.000000e+00> : vector<1x128xf32>
    %75 = tpu.matmul %74, %21, %cst_36 {dimension_numbers = #tpu.dot_dimension_numbers<[1], [0], [0], [1], [0, 0, 1, 1], [], []>} : vector<1x128xf32>, vector<128x128xf32>, vector<1x128xf32> -> vector<1x128xf32>
    %cst_37 = arith.constant 0.949999988 : f32
    %76 = vector.broadcast %cst_37 : f32 to vector<1x128xf32>
    %77 = arith.mulf %76, %74 : vector<1x128xf32>
    %78 = vector.extract_strided_slice %26 {offsets = [6, 0], sizes = [1, 128], strides = [1, 1]} : vector<8x128xf32> to vector<1x128xf32>
    %79 = arith.addf %78, %75 : vector<1x128xf32>
    %cst_38 = arith.constant 0.000000e+00 : f32
    %80 = vector.broadcast %cst_38 : f32 to vector<1x128xf32>
    %81 = arith.maximumf %79, %80 : vector<1x128xf32>
    %82 = arith.addf %77, %81 : vector<1x128xf32>
    %cst_39 = arith.constant dense<0.000000e+00> : vector<1x128xf32>
    %83 = tpu.matmul %82, %21, %cst_39 {dimension_numbers = #tpu.dot_dimension_numbers<[1], [0], [0], [1], [0, 0, 1, 1], [], []>} : vector<1x128xf32>, vector<128x128xf32>, vector<1x128xf32> -> vector<1x128xf32>
    %cst_40 = arith.constant 0.949999988 : f32
    %84 = vector.broadcast %cst_40 : f32 to vector<1x128xf32>
    %85 = arith.mulf %84, %82 : vector<1x128xf32>
    %86 = vector.extract_strided_slice %26 {offsets = [7, 0], sizes = [1, 128], strides = [1, 1]} : vector<8x128xf32> to vector<1x128xf32>
    %87 = arith.addf %86, %83 : vector<1x128xf32>
    %cst_41 = arith.constant 0.000000e+00 : f32
    %88 = vector.broadcast %cst_41 : f32 to vector<1x128xf32>
    %89 = arith.maximumf %87, %88 : vector<1x128xf32>
    %90 = arith.addf %85, %89 : vector<1x128xf32>
    %91 = tpu.concatenate %34, %42, %50, %58, %66, %74, %82, %90 in 0 : vector<1x128xf32>, vector<1x128xf32>, vector<1x128xf32>, vector<1x128xf32>, vector<1x128xf32>, vector<1x128xf32>, vector<1x128xf32>, vector<1x128xf32> -> vector<8x128xf32>
    %92 = arith.index_cast %24 : i32 to index
    %c0_42 = arith.constant 0 : index
    %93 = vector.load %arg7[%92, %c0_42] : memref<8x128xf32, #tpu.memory_space<vmem>>, vector<8x128xf32>
    tpu.vector_store %arg7[%92, %c0_42], %91 {strides = array<i32>} : memref<8x128xf32, #tpu.memory_space<vmem>>, vector<8x128xf32>,
    %c1_i32 = arith.constant 1 : i32
    %c0_43 = arith.constant 0 : index
    %c0_44 = arith.constant 0 : index
    %94 = vector.load %arg8[%c0_43, %c0_44] : memref<1x128xf32, #tpu.memory_space<vmem>>, vector<1x128xf32>
    tpu.vector_store %arg8[%c0_43, %c0_44], %90 {strides = array<i32>} : memref<1x128xf32, #tpu.memory_space<vmem>>, vector<1x128xf32>,
    return
  }
  func.func @transform_0(%arg0: i32) -> (i32, i32) {
    %c0_i32 = arith.constant 0 : i32
    %c0_i32_0 = arith.constant 0 : i32
    return %arg0, %c0_i32 : i32, i32
  }
  func.func @transform_1(%arg0: i32) -> (i32, i32) {
    %c0_i32 = arith.constant 0 : i32
    %c0_i32_0 = arith.constant 0 : i32
    %c0_i32_1 = arith.constant 0 : i32
    return %c0_i32, %c0_i32_0 : i32, i32
  }
  func.func @transform_2(%arg0: i32) -> (i32, i32) {
    %c0_i32 = arith.constant 0 : i32
    %c0_i32_0 = arith.constant 0 : i32
    %c0_i32_1 = arith.constant 0 : i32
    return %c0_i32, %c0_i32_0 : i32, i32
  }
  func.func @transform_3(%arg0: i32) -> (i32, i32) {
    %c0_i32 = arith.constant 0 : i32
    %c0_i32_0 = arith.constant 0 : i32
    %c0_i32_1 = arith.constant 0 : i32
    return %c0_i32, %c0_i32_0 : i32, i32
  }
  func.func @transform_4(%arg0: i32) -> (i32, i32) {
    %c0_i32 = arith.constant 0 : i32
    %c0_i32_0 = arith.constant 0 : i32
    %c0_i32_1 = arith.constant 0 : i32
    return %c0_i32, %c0_i32_0 : i32, i32
  }
  func.func @transform_5(%arg0: i32) -> (i32, i32) {
    %c0_i32 = arith.constant 0 : i32
    %c0_i32_0 = arith.constant 0 : i32
    %c0_i32_1 = arith.constant 0 : i32
    return %c0_i32, %c0_i32_0 : i32, i32
  }
  func.func @transform_6(%arg0: i32) -> (i32, i32) {
    %c0_i32 = arith.constant 0 : i32
    %c0_i32_0 = arith.constant 0 : i32
    return %arg0, %c0_i32 : i32, i32
  }
}

</mosaic_0001>

<llo_original>
// kernel: tpu_custom_call.1
$region0: #{tpu_custom_call.1}
  #allocation0 [shape = 'u32[]', space=smem, size = 0x4, offset = 0x4, fixed_abs, tag = 'smem constant byte address 0x4 - core index']
  #allocation1 [shape = 'u32[144,128]{1,0:T(1,128)}', space=vmem, size = 0x12000, scoped, tag = 'internal scratch']
  #allocation2 [shape = 'f32[1,128]{1,0:T(1,128)}', space=vmem, size = 0x200, scoped, tag = 'scratch operand']
  #allocation3 [shape = 'f32[8,128]{1,0:T(8,128)}', space=vmem, size = 0x1000, scoped, tag = 'scratch operand']
  %s0 = inlined_call_operand.vmem [shape: f32[24,4], index: 0, kind: input, shape index: {}]
  %s1 = inlined_call_operand.vmem [shape: f32[1,128], index: 1, kind: input, shape index: {}]
  %s2 = inlined_call_operand.vmem [shape: f32[1,4], index: 2, kind: input, shape index: {}]
  %s3 = inlined_call_operand.vmem [shape: f32[1,128], index: 3, kind: input, shape index: {}]
  %s4 = inlined_call_operand.vmem [shape: f32[1,128], index: 4, kind: input, shape index: {}]
  %s5 = inlined_call_operand.hbm [shape: f32[128,128], index: 5, kind: input, shape index: {}]
  %s6 = inlined_call_operand.hbm [shape: f32[24,128], index: 6, kind: output, shape index: {}]
  %s7 = sld [smem:[#allocation0]]
  $region65: #{tpu_custom_call.1} parent=0
    _
  %s9 = ssub.s32 1, %s7
  %s10 = scalar_select 0, %s9, %s7
  $region1: #{tpu_custom_call.1} parent=0
    #allocation4 [shape = 'u8[65536]{0}', space=vmem, size = 0x10000, scoped, tag = 'input window, operand 5, single buffered']
    #allocation5 [shape = 's32[2]{0}', space=sflag, size = 0x8, scoped, tag = 'scoped memory for tpu_custom_call.1']
    #allocation6 [shape = 's32[2]{0}', space=sflag, size = 0x8, scoped, tag = 'scoped memory for tpu_custom_call.1']
    #allocation7 [shape = 'u8[8192]{0}', space=vmem, size = 0x2000, scoped, tag = 'output window, operand 0']
    %11 = vsyncpa [#allocation5], 0
    %12 = vsyncpa [#allocation6], 0
    %s13 = scalar_lea.sflag [#allocation6], 1
    %14 = vsyncpa %s13, 0
    loop: start=0, step=1, limit=5
    $region2: #{tpu_custom_call.1} parent=1 // loop_pre_header
      _
    $region3: #{tpu_custom_call.1} parent=1 // loop_header
      %s16 = sphi 0, %s20
      %p17 = scmp.ge.s32.totalorder %s16, 5
      %s26 = sphi 0, %s28
      %s29 = sphi 0, %s26
      %s30 = sphi 0, %s29
      %s46 = sphi 0, %s30
      %s50 = sphi 0, %s50
      %s52 = sphi 0, %s50
      %s53 = sphi 0, %s52
      %s67 = sphi 0, %s53
      %s71 = sphi 0, %s71
      %s73 = sphi 0, %s71
      %s74 = sphi 0, %s73
      %s88 = sphi 0, %s74
      %s92 = sphi 0, %s92
      %s94 = sphi 0, %s92
      %s95 = sphi 0, %s94
      %s109 = sphi 0, %s95
      %s113 = sphi 0, %s113
      %s115 = sphi 0, %s113
      %s116 = sphi 0, %s115
      %s130 = sphi 0, %s116
      %s134 = sphi 0, %s134
      %s136 = sphi 0, %s134
      %s137 = sphi 0, %s136
      %s151 = sphi 0, %s137
      %s157 = sphi 0, %s159
      %s160 = sphi 0, %s157
      %s161 = sphi 0, %s160
      %s177 = sphi 0, %s161
    $region4: #{tpu_custom_call.1} parent=1 // loop_header_branch
      %19 = sbr.rel (%p17) target = $region8
    $region5: #{tpu_custom_call.1} parent=1 // loop_body
      %s21 = ssub.s32 %s16, 1
      %s22 = ssub.s32 %s16, 2
      %s23 = sadd.s32 %s16, 1
      %s24 = ssub.s32 %s16, %s23
      %p25 = scmp.eq.s32.totalorder %s24, 0
      %s27 = sadd.s32 %s26, 1
      %s28 = scalar_select %p25, %s26, %s27
      %p31 = pneg %p25
      %p32 = scmp.eq.s32.totalorder %s16, 2
      %p33 = por %p31, %p32
      %p34 = scmp.ne.s32.totalorder %s26, %s29
      %p35 = scmp.eq.s32.totalorder %s16, 0
      %p36 = por %p34, %p35
      %p37 = scmp.ne.s32.totalorder %s26, %s29
      %p38 = scmp.eq.s32.totalorder %s21, 2
      %p39 = por %p37, %p38
      %p40 = scmp.ne.s32.totalorder %s29, %s30
      %p41 = scmp.eq.s32.totalorder %s21, 0
      %p42 = por %p40, %p41
      %p43 = scmp.ne.s32.totalorder %s29, %s30
      %p44 = scmp.eq.s32.totalorder %s22, 2
      %p45 = por %p43, %p44
      %p47 = scmp.ne.s32.totalorder %s30, %s46
      %p48 = scmp.eq.s32.totalorder %s22, 0
      %p49 = por %p47, %p48
      %s51 = sadd.s32 %s50, 1
      %p54 = scmp.eq.s32.totalorder %s16, 2
      %p55 = scmp.ne.s32.totalorder %s50, %s52
      %p56 = scmp.eq.s32.totalorder %s16, 0
      %p57 = por %p55, %p56
      %p58 = scmp.ne.s32.totalorder %s50, %s52
      %p59 = scmp.eq.s32.totalorder %s21, 2
      %p60 = por %p58, %p59
      %p61 = scmp.ne.s32.totalorder %s52, %s53
      %p62 = scmp.eq.s32.totalorder %s21, 0
      %p63 = por %p61, %p62
      %p64 = scmp.ne.s32.totalorder %s52, %s53
      %p65 = scmp.eq.s32.totalorder %s22, 2
      %p66 = por %p64, %p65
      %p68 = scmp.ne.s32.totalorder %s53, %s67
      %p69 = scmp.eq.s32.totalorder %s22, 0
      %p70 = por %p68, %p69
      %s72 = sadd.s32 %s71, 1
      %p75 = scmp.eq.s32.totalorder %s16, 2
      %p76 = scmp.ne.s32.totalorder %s71, %s73
      %p77 = scmp.eq.s32.totalorder %s16, 0
      %p78 = por %p76, %p77
      %p79 = scmp.ne.s32.totalorder %s71, %s73
      %p80 = scmp.eq.s32.totalorder %s21, 2
      %p81 = por %p79, %p80
      %p82 = scmp.ne.s32.totalorder %s73, %s74
      %p83 = scmp.eq.s32.totalorder %s21, 0
      %p84 = por %p82, %p83
      %p85 = scmp.ne.s32.totalorder %s73, %s74
      %p86 = scmp.eq.s32.totalorder %s22, 2
      %p87 = por %p85, %p86
      %p89 = scmp.ne.s32.totalorder %s74, %s88
      %p90 = scmp.eq.s32.totalorder %s22, 0
      %p91 = por %p89, %p90
      %s93 = sadd.s32 %s92, 1
      %p96 = scmp.eq.s32.totalorder %s16, 2
      %p97 = scmp.ne.s32.totalorder %s92, %s94
      %p98 = scmp.eq.s32.totalorder %s16, 0
      %p99 = por %p97, %p98
      %p100 = scmp.ne.s32.totalorder %s92, %s94
      %p101 = scmp.eq.s32.totalorder %s21, 2
      %p102 = por %p100, %p101
      %p103 = scmp.ne.s32.totalorder %s94, %s95
      %p104 = scmp.eq.s32.totalorder %s21, 0
      %p105 = por %p103, %p104
      %p106 = scmp.ne.s32.totalorder %s94, %s95
      %p107 = scmp.eq.s32.totalorder %s22, 2
      %p108 = por %p106, %p107
      %p110 = scmp.ne.s32.totalorder %s95, %s109
      %p111 = scmp.eq.s32.totalorder %s22, 0
      %p112 = por %p110, %p111
      %s114 = sadd.s32 %s113, 1
      %p117 = scmp.eq.s32.totalorder %s16, 2
      %p118 = scmp.ne.s32.totalorder %s113, %s115
      %p119 = scmp.eq.s32.totalorder %s16, 0
      %p120 = por %p118, %p119
      %p121 = scmp.ne.s32.totalorder %s113, %s115
      %p122 = scmp.eq.s32.totalorder %s21, 2
      %p123 = por %p121, %p122
      %p124 = scmp.ne.s32.totalorder %s115, %s116
      %p125 = scmp.eq.s32.totalorder %s21, 0
      %p126 = por %p124, %p125
      %p127 = scmp.ne.s32.totalorder %s115, %s116
      %p128 = scmp.eq.s32.totalorder %s22, 2
      %p129 = por %p127, %p128
      %p131 = scmp.ne.s32.totalorder %s116, %s130
      %p132 = scmp.eq.s32.totalorder %s22, 0
      %p133 = por %p131, %p132
      %s135 = sadd.s32 %s134, 1
      %p138 = scmp.eq.s32.totalorder %s16, 2
      %p139 = scmp.ne.s32.totalorder %s134, %s136
      %p140 = scmp.eq.s32.totalorder %s16, 0
      %p141 = por %p139, %p140
      %p142 = scmp.ne.s32.totalorder %s134, %s136
      %p143 = scmp.eq.s32.totalorder %s21, 2
      %p144 = por %p142, %p143
      %p145 = scmp.ne.s32.totalorder %s136, %s137
      %p146 = scmp.eq.s32.totalorder %s21, 0
      %p147 = por %p145, %p146
      %p148 = scmp.ne.s32.totalorder %s136, %s137
      %p149 = scmp.eq.s32.totalorder %s22, 2
      %p150 = por %p148, %p149
      %p152 = scmp.ne.s32.totalorder %s137, %s151
      %p153 = scmp.eq.s32.totalorder %s22, 0
      %p154 = por %p152, %p153
      %s155 = ssub.s32 %s16, %s23
      %p156 = scmp.eq.s32.totalorder %s155, 0
      %s158 = sadd.s32 %s157, 1
      %s159 = scalar_select %p156, %s157, %s158
      %p162 = pneg %p156
      %p163 = scmp.eq.s32.totalorder %s16, 2
      %p164 = por %p162, %p163
      %p165 = scmp.ne.s32.totalorder %s157, %s160
      %p166 = scmp.eq.s32.totalorder %s16, 0
      %p167 = por %p165, %p166
      %p168 = scmp.ne.s32.totalorder %s157, %s160
      %p169 = scmp.eq.s32.totalorder %s21, 2
      %p170 = por %p168, %p169
      %p171 = scmp.ne.s32.totalorder %s160, %s161
      %p172 = scmp.eq.s32.totalorder %s21, 0
      %p173 = por %p171, %p172
      %p174 = scmp.ne.s32.totalorder %s160, %s161
      %p175 = scmp.eq.s32.totalorder %s22, 2
      %p176 = por %p174, %p175
      %p178 = scmp.ne.s32.totalorder %s161, %s177
      %p179 = scmp.eq.s32.totalorder %s22, 0
      %p180 = por %p178, %p179
      %p181 = scmp.le.s32.totalorder 1, %s16
      %p182 = scmp.lt.s32.totalorder %s16, 4
      %p183 = pnand %p181, %p182
      %p184 = pneg %p183
      // Predicated region
      $region9: #{tpu_custom_call.1} parent=5 // pred_check
        _
      $region10: #{tpu_custom_call.1} parent=5 // pred_check_branch
        %186 = sbr.rel (%p183) target = $region12
      $region11: #{tpu_custom_call.1} parent=5 // pred_region
        %s187 = ssub.s32 %s16, 1
        // Predicated region
        $region13: #{tpu_custom_call.1} parent=11 // pred_check
          %p188 = pneg %p63
        $region14: #{tpu_custom_call.1} parent=11 // pred_check_branch
          %190 = sbr.rel (%p188) target = $region16
        $region15: #{tpu_custom_call.1} parent=11 // pred_region
          _
        $region16: #{tpu_custom_call.1} parent=11 // pred_fallthru
          _
        // Predicated region
        $region17: #{tpu_custom_call.1} parent=11 // pred_check
          %p191 = pneg %p84
        $region18: #{tpu_custom_call.1} parent=11 // pred_check_branch
          %193 = sbr.rel (%p191) target = $region20
        $region19: #{tpu_custom_call.1} parent=11 // pred_region
          _
        $region20: #{tpu_custom_call.1} parent=11 // pred_fallthru
          _
        // Predicated region
        $region21: #{tpu_custom_call.1} parent=11 // pred_check
          %p194 = pneg %p105
        $region22: #{tpu_custom_call.1} parent=11 // pred_check_branch
          %196 = sbr.rel (%p194) target = $region24
        $region23: #{tpu_custom_call.1} parent=11 // pred_region
          _
        $region24: #{tpu_custom_call.1} parent=11 // pred_fallthru
          _
        // Predicated region
        $region25: #{tpu_custom_call.1} parent=11 // pred_check
          %p197 = pneg %p126
        $region26: #{tpu_custom_call.1} parent=11 // pred_check_branch
          %199 = sbr.rel (%p197) target = $region28
        $region27: #{tpu_custom_call.1} parent=11 // pred_region
          _
        $region28: #{tpu_custom_call.1} parent=11 // pred_fallthru
          _
        // Predicated region
        $region29: #{tpu_custom_call.1} parent=11 // pred_check
          %p200 = pneg %p147
        $region30: #{tpu_custom_call.1} parent=11 // pred_check_branch
          %202 = sbr.rel (%p200) target = $region32
        $region31: #{tpu_custom_call.1} parent=11 // pred_region
          %s204 = ssub.s32 2048, 2048
          %205 = vsyncadd [#allocation5], %s204
          %s206 = sshll.u32 [#allocation4], 4
          %s207 = int_to_ptr.vmem [resolvable:$true] %s206
          %212 = dma.hbm_to_vmem [thread:$0]  %s5, 2048, %s207, [#allocation5], 128, 128, 8
        $region32: #{tpu_custom_call.1} parent=11 // pred_fallthru
          _
      $region12: #{tpu_custom_call.1} parent=5 // pred_fallthru
        _
      %p213 = scmp.lt.s32.totalorder %s16, 3
      // Predicated region
      $region33: #{tpu_custom_call.1} parent=5 // pred_check
        %p214 = pneg %p213
      $region34: #{tpu_custom_call.1} parent=5 // pred_check_branch
        %216 = sbr.rel (%p214) target = $region36
      $region35: #{tpu_custom_call.1} parent=5 // pred_region
        // Predicated region
        $region37: #{tpu_custom_call.1} parent=35 // pred_check
          %p217 = pneg %p36
        $region38: #{tpu_custom_call.1} parent=35 // pred_check_branch
          %219 = sbr.rel (%p217) target = $region40
        $region39: #{tpu_custom_call.1} parent=35 // pred_region
          %p220 = scmp.lt.s32.totalorder %s16, 2
          %s221 = scalar_select %p220, %s16, 2
          %s222 = smul.addr %s221, 8
          %s223 = scalar_lea.vmem %s0, %s222
        $region40: #{tpu_custom_call.1} parent=35 // pred_fallthru
          _
      $region36: #{tpu_custom_call.1} parent=5 // pred_fallthru
        _
      %p224 = scmp.le.s32.totalorder 1, %s16
      %p225 = scmp.lt.s32.totalorder %s16, 4
      %p226 = pnand %p224, %p225
      %p227 = pneg %p226
      // Predicated region
      $region41: #{tpu_custom_call.1} parent=5 // pred_check
        _
      $region42: #{tpu_custom_call.1} parent=5 // pred_check_branch
        %229 = sbr.rel (%p226) target = $region44
      $region43: #{tpu_custom_call.1} parent=5 // pred_region
        %s230 = ssub.s32 %s16, 1
        // Predicated region
        $region45: #{tpu_custom_call.1} parent=43 // pred_check
          %p231 = pneg %p147
        $region46: #{tpu_custom_call.1} parent=43 // pred_check_branch
          %233 = sbr.rel (%p231) target = $region48
        $region47: #{tpu_custom_call.1} parent=43 // pred_region
          %234 = dma.done [#allocation5], 2048
        $region48: #{tpu_custom_call.1} parent=43 // pred_fallthru
          _
        %p235 = scmp.lt.s32.totalorder %s21, 2
        %s236 = scalar_select %p235, %s21, 2
        %s237 = smul.addr %s236, 8
        %s238 = scalar_lea.vmem %s0, %s237
        %p239 = pneg %p42
        %p240 = pneg %p39
        %p241 = pneg %p63
        %p242 = pneg %p60
        %p243 = pneg %p84
        %p244 = pneg %p81
        %p245 = pneg %p105
        %p246 = pneg %p102
        %p247 = pneg %p126
        %p248 = pneg %p123
        %p249 = pneg %p147
        %p250 = pneg %p144
        %p251 = pneg %p173
        %p252 = pneg %p170
        %s253 = sand.u32 %s160, 1
        %s254 = scalar_lea.sflag [#allocation6], %s253
        %s255 = sand.u32 %s160, 1
        %s256 = smul.addr %s255, 8
        %s257 = scalar_lea.vmem [#allocation7], %s256
        %p258 = scmp.lt.s32.totalorder %s21, 2
        %s259 = scalar_select %p258, %s21, 2
        %s260 = smul.addr %s259, 8
        %s261 = scalar_lea.vmem %s0, %s260
        %p262 = scmp.eq.s32.totalorder %s21, 0
        // Predicated region
        $region49: #{tpu_custom_call.1} parent=43 // pred_check
          %p263 = pneg %p262
        $region50: #{tpu_custom_call.1} parent=43 // pred_check_branch
          %265 = sbr.rel (%p263) target = $region52
        $region51: #{tpu_custom_call.1} parent=43 // pred_region
          %v266 = vld [vmem:[%s1] sm:$0x1]
          %267 = vst [vmem:[#allocation2] sm:$0x1] %v266
        $region52: #{tpu_custom_call.1} parent=43 // pred_fallthru
          _
        %v268 = vld [vmem:[%s261] sm:$0xff]
        %v269 = vld [vmem:[%s2] sm:$0x1]
        %v271 = vlaneseq
        %v272 = vshrl.u32 %v271, 7
        %v273 = vsub.s32 0, %v272
        %v274 = vrot.slane %v269, %v273
        %v276 = vmul.f32 %v268, %v274
        %vm277 = vcmask 31744
        %v278 = vsel %vm277, %v276, 0.0
        %279 = vadd.xlane.f32.xlu0 %v278
        %v280 = vpop.xlane.xlu0 %279
        %v281 = vld [vmem:[%s3] sm:$0x1]
        %v283 = vlaneseq
        %v284 = vshrl.u32 %v283, 7
        %v285 = vsub.s32 0, %v284
        %v286 = vrot.slane %v281, %v285
        %v288 = vmul.f32 %v280, %v286
        %v289 = vld [vmem:[%s4] sm:$0x1]
        %v291 = vlaneseq
        %v292 = vshrl.u32 %v291, 7
        %v293 = vsub.s32 0, %v292
        %v294 = vrot.slane %v289, %v293
        %v296 = vadd.f32 %v288, %v294
        %v297 = vmul.f32 %v296, 0.05
        %298 = vst [vmem:[#allocation3] sm:$0xff] %v297
        %v299 = vld [vmem:[#allocation4] sm:$0xff]
        %v300 = vld [vmem:[#allocation4 + $0x8] sm:$0xff]
        %v301 = vld [vmem:[#allocation4 + $0x10] sm:$0xff]
        %v302 = vld [vmem:[#allocation4 + $0x18] sm:$0xff]
        %v303 = vld [vmem:[#allocation4 + $0x20] sm:$0xff]
        %v304 = vld [vmem:[#allocation4 + $0x28] sm:$0xff]
        %v305 = vld [vmem:[#allocation4 + $0x30] sm:$0xff]
        %v306 = vld [vmem:[#allocation4 + $0x38] sm:$0xff]
        %v307 = vld [vmem:[#allocation4 + $0x40] sm:$0xff]
        %v308 = vld [vmem:[#allocation4 + $0x48] sm:$0xff]
        %v309 = vld [vmem:[#allocation4 + $0x50] sm:$0xff]
        %v310 = vld [vmem:[#allocation4 + $0x58] sm:$0xff]
        %v311 = vld [vmem:[#allocation4 + $0x60] sm:$0xff]
        %v312 = vld [vmem:[#allocation4 + $0x68] sm:$0xff]
        %v313 = vld [vmem:[#allocation4 + $0x70] sm:$0xff]
        %v314 = vld [vmem:[#allocation4 + $0x78] sm:$0xff]
        %v315 = vmul.f32 %v299, 0.05
        %v316 = vmul.f32 %v300, 0.05
        %v317 = vmul.f32 %v301, 0.05
        %v318 = vmul.f32 %v302, 0.05
        %v319 = vmul.f32 %v303, 0.05
        %v320 = vmul.f32 %v304, 0.05
        %v321 = vmul.f32 %v305, 0.05
        %v322 = vmul.f32 %v306, 0.05
        %v323 = vmul.f32 %v307, 0.05
        %v324 = vmul.f32 %v308, 0.05
        %v325 = vmul.f32 %v309, 0.05
        %v326 = vmul.f32 %v310, 0.05
        %v327 = vmul.f32 %v311, 0.05
        %v328 = vmul.f32 %v312, 0.05
        %v329 = vmul.f32 %v313, 0.05
        %v330 = vmul.f32 %v314, 0.05
        %v331 = vld [vmem:[#allocation2] sm:$0x1]
        %v332 = vld [vmem:[#allocation3] sm:$0xff]
        %333 = vmatprep.subr.mxu0 0.0
        %334 = vmatpush1.msra.mxu0 %v330
        %335 = vmatprep.subr.mxu0 0.0
        %336 = vmatpush1.msra.mxu0 %v329
        %337 = vmatprep.subr.mxu0 0.0
        %338 = vmatpush1.msra.mxu0 %v328
        %339 = vmatprep.subr.mxu0 0.0
        %340 = vmatpush1.msra.mxu0 %v327
        %341 = vmatprep.subr.mxu0 0.0
        %342 = vmatpush1.msra.mxu0 %v326
        %343 = vmatprep.subr.mxu0 0.0
        %344 = vmatpush1.msra.mxu0 %v325
        %345 = vmatprep.subr.mxu0 0.0
        %346 = vmatpush1.msra.mxu0 %v324
        %347 = vmatprep.subr.mxu0 0.0
        %348 = vmatpush1.msra.mxu0 %v323
        %349 = vmatprep.subr.mxu0 0.0
        %350 = vmatpush1.msra.mxu0 %v322
        %351 = vmatprep.subr.mxu0 0.0
        %352 = vmatpush1.msra.mxu0 %v321
        %353 = vmatprep.subr.mxu0 0.0
        %354 = vmatpush1.msra.mxu0 %v320
        %355 = vmatprep.subr.mxu0 0.0
        %356 = vmatpush1.msra.mxu0 %v319
        %357 = vmatprep.subr.mxu0 0.0
        %358 = vmatpush1.msra.mxu0 %v318
        %359 = vmatprep.subr.mxu0 0.0
        %360 = vmatpush1.msra.mxu0 %v317
        %361 = vmatprep.subr.mxu0 0.0
        %362 = vmatpush1.msra.mxu0 %v316
        %363 = vmatprep.subr.mxu0 0.0
        %364 = vmatpush1.msra.mxu0 %v315
        %365 = vmatprep.subr.mxu0 0.0
        %366 = vmatpush2.msra.mxu0 0.0
        %367 = vmatprep.subr.mxu0 0.0
        %368 = vmatpush2.msra.mxu0 0.0
        %369 = vmatprep.subr.mxu0 0.0
        %370 = vmatpush2.msra.mxu0 0.0
        %371 = vmatprep.subr.mxu0 0.0
        %372 = vmatpush2.msra.mxu0 0.0
        %373 = vmatprep.subr.mxu0 0.0
        %374 = vmatpush2.msra.mxu0 0.0
        %375 = vmatprep.subr.mxu0 0.0
        %376 = vmatpush2.msra.mxu0 0.0
        %377 = vmatprep.subr.mxu0 0.0
        %378 = vmatpush2.msra.mxu0 0.0
        %379 = vmatprep.subr.mxu0 0.0
        %380 = vmatpush2.msra.mxu0 0.0
        %381 = vmatprep.subr.mxu0 0.0
        %382 = vmatpush2.msra.mxu0 0.0
        %383 = vmatprep.subr.mxu0 0.0
        %384 = vmatpush2.msra.mxu0 0.0
        %385 = vmatprep.subr.mxu0 0.0
        %386 = vmatpush2.msra.mxu0 0.0
        %387 = vmatprep.subr.mxu0 0.0
        %388 = vmatpush2.msra.mxu0 0.0
        %389 = vmatprep.subr.mxu0 0.0
        %390 = vmatpush2.msra.mxu0 0.0
        %391 = vmatprep.subr.mxu0 0.0
        %392 = vmatpush2.msra.mxu0 0.0
        %393 = vmatprep.subr.mxu0 0.0
        %394 = vmatpush2.msra.mxu0 0.0
        %395 = vmatprep.subr.mxu0 0.0
        %396 = vmatpush2.msra.mxu0 0.0
        %397 = vmatprep.mubr.f32.mxu0 0.0
        %398 = vmatmul.mubr.f32.gmra.mxu0 %v331
        %v399 = vpop.f32.mrf.mxu0
        %v400 = vadd.f32 0.0, %v399
        %v401 = vpop.f32.mrf.mxu0
        %402 = vdwg.mxu0
        %v403 = vmul.f32 %v331, 0.95
        %v404 = vadd.f32 %v332, %v400
        %v405 = vmax.f32 %v404, 0.0
        %v406 = vadd.f32 %v403, %v405
        %407 = vmatprep.subr.mxu0 0.0
        %408 = vmatpush1.msra.mxu0 %v330
        %409 = vmatprep.subr.mxu0 0.0
        %410 = vmatpush1.msra.mxu0 %v329
        %411 = vmatprep.subr.mxu0 0.0
        %412 = vmatpush1.msra.mxu0 %v328
        %413 = vmatprep.subr.mxu0 0.0
        %414 = vmatpush1.msra.mxu0 %v327
        %415 = vmatprep.subr.mxu0 0.0
        %416 = vmatpush1.msra.mxu0 %v326
        %417 = vmatprep.subr.mxu0 0.0
        %418 = vmatpush1.msra.mxu0 %v325
        %419 = vmatprep.subr.mxu0 0.0
        %420 = vmatpush1.msra.mxu0 %v324
        %421 = vmatprep.subr.mxu0 0.0
        %422 = vmatpush1.msra.mxu0 %v323
        %423 = vmatprep.subr.mxu0 0.0
        %424 = vmatpush1.msra.mxu0 %v322
        %425 = vmatprep.subr.mxu0 0.0
        %426 = vmatpush1.msra.mxu0 %v321
        %427 = vmatprep.subr.mxu0 0.0
        %428 = vmatpush1.msra.mxu0 %v320
        %429 = vmatprep.subr.mxu0 0.0
        %430 = vmatpush1.msra.mxu0 %v319
        %431 = vmatprep.subr.mxu0 0.0
        %432 = vmatpush1.msra.mxu0 %v318
        %433 = vmatprep.subr.mxu0 0.0
        %434 = vmatpush1.msra.mxu0 %v317
        %435 = vmatprep.subr.mxu0 0.0
        %436 = vmatpush1.msra.mxu0 %v316
        %437 = vmatprep.subr.mxu0 0.0
        %438 = vmatpush1.msra.mxu0 %v315
        %439 = vmatprep.subr.mxu0 0.0
        %440 = vmatpush2.msra.mxu0 0.0
        %441 = vmatprep.subr.mxu0 0.0
        %442 = vmatpush2.msra.mxu0 0.0
        %443 = vmatprep.subr.mxu0 0.0
        %444 = vmatpush2.msra.mxu0 0.0
        %445 = vmatprep.subr.mxu0 0.0
        %446 = vmatpush2.msra.mxu0 0.0
        %447 = vmatprep.subr.mxu0 0.0
        %448 = vmatpush2.msra.mxu0 0.0
        %449 = vmatprep.subr.mxu0 0.0
        %450 = vmatpush2.msra.mxu0 0.0
        %451 = vmatprep.subr.mxu0 0.0
        %452 = vmatpush2.msra.mxu0 0.0
        %453 = vmatprep.subr.mxu0 0.0
        %454 = vmatpush2.msra.mxu0 0.0
        %455 = vmatprep.subr.mxu0 0.0
        %456 = vmatpush2.msra.mxu0 0.0
        %457 = vmatprep.subr.mxu0 0.0
        %458 = vmatpush2.msra.mxu0 0.0
        %459 = vmatprep.subr.mxu0 0.0
        %460 = vmatpush2.msra.mxu0 0.0
        %461 = vmatprep.subr.mxu0 0.0
        %462 = vmatpush2.msra.mxu0 0.0
        %463 = vmatprep.subr.mxu0 0.0
        %464 = vmatpush2.msra.mxu0 0.0
        %465 = vmatprep.subr.mxu0 0.0
        %466 = vmatpush2.msra.mxu0 0.0
        %467 = vmatprep.subr.mxu0 0.0
        %468 = vmatpush2.msra.mxu0 0.0
        %469 = vmatprep.subr.mxu0 0.0
        %470 = vmatpush2.msra.mxu0 0.0
        %471 = vmatprep.mubr.f32.mxu0 0.0
        %472 = vmatmul.mubr.f32.gmra.mxu0 %v406
        %v473 = vpop.f32.mrf.mxu0
        %v474 = vadd.f32 0.0, %v473
        %v475 = vpop.f32.mrf.mxu0
        %476 = vdwg.mxu0
        %v477 = vmul.f32 %v406, 0.95
        %v479 = vrot.slane %v474, 7
        %v481 = vadd.f32 %v332, %v479
        %v482 = vmax.f32 %v481, 0.0
        %v485 = vunpack.c.l.s4 1966171168
        %v486 = vunpack.c.0.s8 %v485
        %v487 = vlaneseq
        %v488 = vshrl.u32 %v487, 7
        %v489 = vsub.s32 %v486, %v488
        %v490 = vrot.slane %v482, %v489
        %v491 = vcombine.high %v490, %v490
        %v493 = vunpack.c.l.s4 1966171168
        %v494 = vunpack.c.0.s8 %v493
        %v495 = vlaneseq
        %v496 = vshrl.u32 %v495, 7
        %v497 = vsub.s32 %v494, %v496
        %v498 = vrot.slane %v491, %v497
        %v500 = vadd.f32 %v477, %v498
        %501 = vmatprep.subr.mxu0 0.0
        %502 = vmatpush1.msra.mxu0 %v330
        %503 = vmatprep.subr.mxu0 0.0
        %504 = vmatpush1.msra.mxu0 %v329
        %505 = vmatprep.subr.mxu0 0.0
        %506 = vmatpush1.msra.mxu0 %v328
        %507 = vmatprep.subr.mxu0 0.0
        %508 = vmatpush1.msra.mxu0 %v327
        %509 = vmatprep.subr.mxu0 0.0
        %510 = vmatpush1.msra.mxu0 %v326
        %511 = vmatprep.subr.mxu0 0.0
        %512 = vmatpush1.msra.mxu0 %v325
        %513 = vmatprep.subr.mxu0 0.0
        %514 = vmatpush1.msra.mxu0 %v324
        %515 = vmatprep.subr.mxu0 0.0
        %516 = vmatpush1.msra.mxu0 %v323
        %517 = vmatprep.subr.mxu0 0.0
        %518 = vmatpush1.msra.mxu0 %v322
        %519 = vmatprep.subr.mxu0 0.0
        %520 = vmatpush1.msra.mxu0 %v321
        %521 = vmatprep.subr.mxu0 0.0
        %522 = vmatpush1.msra.mxu0 %v320
        %523 = vmatprep.subr.mxu0 0.0
        %524 = vmatpush1.msra.mxu0 %v319
        %525 = vmatprep.subr.mxu0 0.0
        %526 = vmatpush1.msra.mxu0 %v318
        %527 = vmatprep.subr.mxu0 0.0
        %528 = vmatpush1.msra.mxu0 %v317
        %529 = vmatprep.subr.mxu0 0.0
        %530 = vmatpush1.msra.mxu0 %v316
        %531 = vmatprep.subr.mxu0 0.0
        %532 = vmatpush1.msra.mxu0 %v315
        %533 = vmatprep.subr.mxu0 0.0
        %534 = vmatpush2.msra.mxu0 0.0
        %535 = vmatprep.subr.mxu0 0.0
        %536 = vmatpush2.msra.mxu0 0.0
        %537 = vmatprep.subr.mxu0 0.0
        %538 = vmatpush2.msra.mxu0 0.0
        %539 = vmatprep.subr.mxu0 0.0
        %540 = vmatpush2.msra.mxu0 0.0
        %541 = vmatprep.subr.mxu0 0.0
        %542 = vmatpush2.msra.mxu0 0.0
        %543 = vmatprep.subr.mxu0 0.0
        %544 = vmatpush2.msra.mxu0 0.0
        %545 = vmatprep.subr.mxu0 0.0
        %546 = vmatpush2.msra.mxu0 0.0
        %547 = vmatprep.subr.mxu0 0.0
        %548 = vmatpush2.msra.mxu0 0.0
        %549 = vmatprep.subr.mxu0 0.0
        %550 = vmatpush2.msra.mxu0 0.0
        %551 = vmatprep.subr.mxu0 0.0
        %552 = vmatpush2.msra.mxu0 0.0
        %553 = vmatprep.subr.mxu0 0.0
        %554 = vmatpush2.msra.mxu0 0.0
        %555 = vmatprep.subr.mxu0 0.0
        %556 = vmatpush2.msra.mxu0 0.0
        %557 = vmatprep.subr.mxu0 0.0
        %558 = vmatpush2.msra.mxu0 0.0
        %559 = vmatprep.subr.mxu0 0.0
        %560 = vmatpush2.msra.mxu0 0.0
        %561 = vmatprep.subr.mxu0 0.0
        %562 = vmatpush2.msra.mxu0 0.0
        %563 = vmatprep.subr.mxu0 0.0
        %564 = vmatpush2.msra.mxu0 0.0
        %565 = vmatprep.mubr.f32.mxu0 0.0
        %566 = vmatmul.mubr.f32.gmra.mxu0 %v500
        %v567 = vpop.f32.mrf.mxu0
        %v568 = vadd.f32 0.0, %v567
        %v569 = vpop.f32.mrf.mxu0
        %570 = vdwg.mxu0
        %v571 = vmul.f32 %v500, 0.95
        %v573 = vrot.slane %v568, 6
        %v575 = vadd.f32 %v332, %v573
        %v576 = vmax.f32 %v575, 0.0
        %v579 = vunpack.c.l.s4 1966171168
        %v580 = vunpack.c.0.s8 %v579
        %v581 = vlaneseq
        %v582 = vshrl.u32 %v581, 7
        %v583 = vsub.s32 %v580, %v582
        %v584 = vrot.slane %v576, %v583
        %v586 = vunpack.c.l.s4 1966171168
        %v587 = vunpack.c.0.s8 %v586
        %v588 = vlaneseq
        %v589 = vshrl.u32 %v588, 7
        %v590 = vsub.s32 %v587, %v589
        %v591 = vrot.slane %v584, %v590
        %v592 = vcombine.high %v591, %v591
        %v594 = vadd.f32 %v571, %v592
        %595 = vmatprep.subr.mxu0 0.0
        %596 = vmatpush1.msra.mxu0 %v330
        %597 = vmatprep.subr.mxu0 0.0
        %598 = vmatpush1.msra.mxu0 %v329
        %599 = vmatprep.subr.mxu0 0.0
        %600 = vmatpush1.msra.mxu0 %v328
        %601 = vmatprep.subr.mxu0 0.0
        %602 = vmatpush1.msra.mxu0 %v327
        %603 = vmatprep.subr.mxu0 0.0
        %604 = vmatpush1.msra.mxu0 %v326
        %605 = vmatprep.subr.mxu0 0.0
        %606 = vmatpush1.msra.mxu0 %v325
        %607 = vmatprep.subr.mxu0 0.0
        %608 = vmatpush1.msra.mxu0 %v324
        %609 = vmatprep.subr.mxu0 0.0
        %610 = vmatpush1.msra.mxu0 %v323
        %611 = vmatprep.subr.mxu0 0.0
        %612 = vmatpush1.msra.mxu0 %v322
        %613 = vmatprep.subr.mxu0 0.0
        %614 = vmatpush1.msra.mxu0 %v321
        %615 = vmatprep.subr.mxu0 0.0
        %616 = vmatpush1.msra.mxu0 %v320
        %617 = vmatprep.subr.mxu0 0.0
        %618 = vmatpush1.msra.mxu0 %v319
        %619 = vmatprep.subr.mxu0 0.0
        %620 = vmatpush1.msra.mxu0 %v318
        %621 = vmatprep.subr.mxu0 0.0
        %622 = vmatpush1.msra.mxu0 %v317
        %623 = vmatprep.subr.mxu0 0.0
        %624 = vmatpush1.msra.mxu0 %v316
        %625 = vmatprep.subr.mxu0 0.0
        %626 = vmatpush1.msra.mxu0 %v315
        %627 = vmatprep.subr.mxu0 0.0
        %628 = vmatpush2.msra.mxu0 0.0
        %629 = vmatprep.subr.mxu0 0.0
        %630 = vmatpush2.msra.mxu0 0.0
        %631 = vmatprep.subr.mxu0 0.0
        %632 = vmatpush2.msra.mxu0 0.0
        %633 = vmatprep.subr.mxu0 0.0
        %634 = vmatpush2.msra.mxu0 0.0
        %635 = vmatprep.subr.mxu0 0.0
        %636 = vmatpush2.msra.mxu0 0.0
        %637 = vmatprep.subr.mxu0 0.0
        %638 = vmatpush2.msra.mxu0 0.0
        %639 = vmatprep.subr.mxu0 0.0
        %640 = vmatpush2.msra.mxu0 0.0
        %641 = vmatprep.subr.mxu0 0.0
        %642 = vmatpush2.msra.mxu0 0.0
        %643 = vmatprep.subr.mxu0 0.0
        %644 = vmatpush2.msra.mxu0 0.0
        %645 = vmatprep.subr.mxu0 0.0
        %646 = vmatpush2.msra.mxu0 0.0
        %647 = vmatprep.subr.mxu0 0.0
        %648 = vmatpush2.msra.mxu0 0.0
        %649 = vmatprep.subr.mxu0 0.0
        %650 = vmatpush2.msra.mxu0 0.0
        %651 = vmatprep.subr.mxu0 0.0
        %652 = vmatpush2.msra.mxu0 0.0
        %653 = vmatprep.subr.mxu0 0.0
        %654 = vmatpush2.msra.mxu0 0.0
        %655 = vmatprep.subr.mxu0 0.0
        %656 = vmatpush2.msra.mxu0 0.0
        %657 = vmatprep.subr.mxu0 0.0
        %658 = vmatpush2.msra.mxu0 0.0
        %659 = vmatprep.mubr.f32.mxu0 0.0
        %660 = vmatmul.mubr.f32.gmra.mxu0 %v594
        %v661 = vpop.f32.mrf.mxu0
        %v662 = vadd.f32 0.0, %v661
        %v663 = vpop.f32.mrf.mxu0
        %664 = vdwg.mxu0
        %v665 = vmul.f32 %v594, 0.95
        %v667 = vrot.slane %v662, 5
        %v669 = vadd.f32 %v332, %v667
        %v670 = vmax.f32 %v669, 0.0
        %v673 = vunpack.c.l.s4 1966171168
        %v674 = vunpack.c.0.s8 %v673
        %v675 = vlaneseq
        %v676 = vshrl.u32 %v675, 7
        %v677 = vsub.s32 %v674, %v676
        %v678 = vrot.slane %v670, %v677
        %v679 = vcombine.high %v678, %v678
        %v681 = vunpack.c.l.s4 1966171168
        %v682 = vunpack.c.0.s8 %v681
        %v683 = vlaneseq
        %v684 = vshrl.u32 %v683, 7
        %v685 = vsub.s32 %v682, %v684
        %v686 = vrot.slane %v679, %v685
        %v687 = vcombine.high %v686, %v686
        %v689 = vadd.f32 %v665, %v687
        %690 = vmatprep.subr.mxu0 0.0
        %691 = vmatpush1.msra.mxu0 %v330
        %692 = vmatprep.subr.mxu0 0.0
        %693 = vmatpush1.msra.mxu0 %v329
        %694 = vmatprep.subr.mxu0 0.0
        %695 = vmatpush1.msra.mxu0 %v328
        %696 = vmatprep.subr.mxu0 0.0
        %697 = vmatpush1.msra.mxu0 %v327
        %698 = vmatprep.subr.mxu0 0.0
        %699 = vmatpush1.msra.mxu0 %v326
        %700 = vmatprep.subr.mxu0 0.0
        %701 = vmatpush1.msra.mxu0 %v325
        %702 = vmatprep.subr.mxu0 0.0
        %703 = vmatpush1.msra.mxu0 %v324
        %704 = vmatprep.subr.mxu0 0.0
        %705 = vmatpush1.msra.mxu0 %v323
        %706 = vmatprep.subr.mxu0 0.0
        %707 = vmatpush1.msra.mxu0 %v322
        %708 = vmatprep.subr.mxu0 0.0
        %709 = vmatpush1.msra.mxu0 %v321
        %710 = vmatprep.subr.mxu0 0.0
        %711 = vmatpush1.msra.mxu0 %v320
        %712 = vmatprep.subr.mxu0 0.0
        %713 = vmatpush1.msra.mxu0 %v319
        %714 = vmatprep.subr.mxu0 0.0
        %715 = vmatpush1.msra.mxu0 %v318
        %716 = vmatprep.subr.mxu0 0.0
        %717 = vmatpush1.msra.mxu0 %v317
        %718 = vmatprep.subr.mxu0 0.0
        %719 = vmatpush1.msra.mxu0 %v316
        %720 = vmatprep.subr.mxu0 0.0
        %721 = vmatpush1.msra.mxu0 %v315
        %722 = vmatprep.subr.mxu0 0.0
        %723 = vmatpush2.msra.mxu0 0.0
        %724 = vmatprep.subr.mxu0 0.0
        %725 = vmatpush2.msra.mxu0 0.0
        %726 = vmatprep.subr.mxu0 0.0
        %727 = vmatpush2.msra.mxu0 0.0
        %728 = vmatprep.subr.mxu0 0.0
        %729 = vmatpush2.msra.mxu0 0.0
        %730 = vmatprep.subr.mxu0 0.0
        %731 = vmatpush2.msra.mxu0 0.0
        %732 = vmatprep.subr.mxu0 0.0
        %733 = vmatpush2.msra.mxu0 0.0
        %734 = vmatprep.subr.mxu0 0.0
        %735 = vmatpush2.msra.mxu0 0.0
        %736 = vmatprep.subr.mxu0 0.0
        %737 = vmatpush2.msra.mxu0 0.0
        %738 = vmatprep.subr.mxu0 0.0
        %739 = vmatpush2.msra.mxu0 0.0
        %740 = vmatprep.subr.mxu0 0.0
        %741 = vmatpush2.msra.mxu0 0.0
        %742 = vmatprep.subr.mxu0 0.0
        %743 = vmatpush2.msra.mxu0 0.0
        %744 = vmatprep.subr.mxu0 0.0
        %745 = vmatpush2.msra.mxu0 0.0
        %746 = vmatprep.subr.mxu0 0.0
        %747 = vmatpush2.msra.mxu0 0.0
        %748 = vmatprep.subr.mxu0 0.0
        %749 = vmatpush2.msra.mxu0 0.0
        %750 = vmatprep.subr.mxu0 0.0
        %751 = vmatpush2.msra.mxu0 0.0
        %752 = vmatprep.subr.mxu0 0.0
        %753 = vmatpush2.msra.mxu0 0.0
        %754 = vmatprep.mubr.f32.mxu0 0.0
        %755 = vmatmul.mubr.f32.gmra.mxu0 %v689
        %v756 = vpop.f32.mrf.mxu0
        %v757 = vadd.f32 0.0, %v756
        %v758 = vpop.f32.mrf.mxu0
        %759 = vdwg.mxu0
        %v760 = vmul.f32 %v689, 0.95
        %v762 = vrot.slane %v757, 4
        %v764 = vadd.f32 %v332, %v762
        %v765 = vmax.f32 %v764, 0.0
        %v767 = vcombine.high %v765, %v765
        %v769 = vunpack.c.l.s4 1966171168
        %v770 = vunpack.c.0.s8 %v769
        %v771 = vlaneseq
        %v772 = vshrl.u32 %v771, 7
        %v773 = vsub.s32 %v770, %v772
        %v774 = vrot.slane %v767, %v773
        %v776 = vunpack.c.l.s4 1966171168
        %v777 = vunpack.c.0.s8 %v776
        %v778 = vlaneseq
        %v779 = vshrl.u32 %v778, 7
        %v780 = vsub.s32 %v777, %v779
        %v781 = vrot.slane %v774, %v780
        %v783 = vadd.f32 %v760, %v781
        %784 = vmatprep.subr.mxu0 0.0
        %785 = vmatpush1.msra.mxu0 %v330
        %786 = vmatprep.subr.mxu0 0.0
        %787 = vmatpush1.msra.mxu0 %v329
        %788 = vmatprep.subr.mxu0 0.0
        %789 = vmatpush1.msra.mxu0 %v328
        %790 = vmatprep.subr.mxu0 0.0
        %791 = vmatpush1.msra.mxu0 %v327
        %792 = vmatprep.subr.mxu0 0.0
        %793 = vmatpush1.msra.mxu0 %v326
        %794 = vmatprep.subr.mxu0 0.0
        %795 = vmatpush1.msra.mxu0 %v325
        %796 = vmatprep.subr.mxu0 0.0
        %797 = vmatpush1.msra.mxu0 %v324
        %798 = vmatprep.subr.mxu0 0.0
        %799 = vmatpush1.msra.mxu0 %v323
        %800 = vmatprep.subr.mxu0 0.0
        %801 = vmatpush1.msra.mxu0 %v322
        %802 = vmatprep.subr.mxu0 0.0
        %803 = vmatpush1.msra.mxu0 %v321
        %804 = vmatprep.subr.mxu0 0.0
        %805 = vmatpush1.msra.mxu0 %v320
        %806 = vmatprep.subr.mxu0 0.0
        %807 = vmatpush1.msra.mxu0 %v319
        %808 = vmatprep.subr.mxu0 0.0
        %809 = vmatpush1.msra.mxu0 %v318
        %810 = vmatprep.subr.mxu0 0.0
        %811 = vmatpush1.msra.mxu0 %v317
        %812 = vmatprep.subr.mxu0 0.0
        %813 = vmatpush1.msra.mxu0 %v316
        %814 = vmatprep.subr.mxu0 0.0
        %815 = vmatpush1.msra.mxu0 %v315
        %816 = vmatprep.subr.mxu0 0.0
        %817 = vmatpush2.msra.mxu0 0.0
        %818 = vmatprep.subr.mxu0 0.0
        %819 = vmatpush2.msra.mxu0 0.0
        %820 = vmatprep.subr.mxu0 0.0
        %821 = vmatpush2.msra.mxu0 0.0
        %822 = vmatprep.subr.mxu0 0.0
        %823 = vmatpush2.msra.mxu0 0.0
        %824 = vmatprep.subr.mxu0 0.0
        %825 = vmatpush2.msra.mxu0 0.0
        %826 = vmatprep.subr.mxu0 0.0
        %827 = vmatpush2.msra.mxu0 0.0
        %828 = vmatprep.subr.mxu0 0.0
        %829 = vmatpush2.msra.mxu0 0.0
        %830 = vmatprep.subr.mxu0 0.0
        %831 = vmatpush2.msra.mxu0 0.0
        %832 = vmatprep.subr.mxu0 0.0
        %833 = vmatpush2.msra.mxu0 0.0
        %834 = vmatprep.subr.mxu0 0.0
        %835 = vmatpush2.msra.mxu0 0.0
        %836 = vmatprep.subr.mxu0 0.0
        %837 = vmatpush2.msra.mxu0 0.0
        %838 = vmatprep.subr.mxu0 0.0
        %839 = vmatpush2.msra.mxu0 0.0
        %840 = vmatprep.subr.mxu0 0.0
        %841 = vmatpush2.msra.mxu0 0.0
        %842 = vmatprep.subr.mxu0 0.0
        %843 = vmatpush2.msra.mxu0 0.0
        %844 = vmatprep.subr.mxu0 0.0
        %845 = vmatpush2.msra.mxu0 0.0
        %846 = vmatprep.subr.mxu0 0.0
        %847 = vmatpush2.msra.mxu0 0.0
        %848 = vmatprep.mubr.f32.mxu0 0.0
        %849 = vmatmul.mubr.f32.gmra.mxu0 %v783
        %v850 = vpop.f32.mrf.mxu0
        %v851 = vadd.f32 0.0, %v850
        %v852 = vpop.f32.mrf.mxu0
        %853 = vdwg.mxu0
        %v854 = vmul.f32 %v783, 0.95
        %v856 = vrot.slane %v851, 3
        %v858 = vadd.f32 %v332, %v856
        %v859 = vmax.f32 %v858, 0.0
        %v861 = vcombine.high %v859, %v859
        %v863 = vunpack.c.l.s4 1966171168
        %v864 = vunpack.c.0.s8 %v863
        %v865 = vlaneseq
        %v866 = vshrl.u32 %v865, 7
        %v867 = vsub.s32 %v864, %v866
        %v868 = vrot.slane %v861, %v867
        %v869 = vcombine.high %v868, %v868
        %v871 = vunpack.c.l.s4 1966171168
        %v872 = vunpack.c.0.s8 %v871
        %v873 = vlaneseq
        %v874 = vshrl.u32 %v873, 7
        %v875 = vsub.s32 %v872, %v874
        %v876 = vrot.slane %v869, %v875
        %v878 = vadd.f32 %v854, %v876
        %879 = vmatprep.subr.mxu0 0.0
        %880 = vmatpush1.msra.mxu0 %v330
        %881 = vmatprep.subr.mxu0 0.0
        %882 = vmatpush1.msra.mxu0 %v329
        %883 = vmatprep.subr.mxu0 0.0
        %884 = vmatpush1.msra.mxu0 %v328
        %885 = vmatprep.subr.mxu0 0.0
        %886 = vmatpush1.msra.mxu0 %v327
        %887 = vmatprep.subr.mxu0 0.0
        %888 = vmatpush1.msra.mxu0 %v326
        %889 = vmatprep.subr.mxu0 0.0
        %890 = vmatpush1.msra.mxu0 %v325
        %891 = vmatprep.subr.mxu0 0.0
        %892 = vmatpush1.msra.mxu0 %v324
        %893 = vmatprep.subr.mxu0 0.0
        %894 = vmatpush1.msra.mxu0 %v323
        %895 = vmatprep.subr.mxu0 0.0
        %896 = vmatpush1.msra.mxu0 %v322
        %897 = vmatprep.subr.mxu0 0.0
        %898 = vmatpush1.msra.mxu0 %v321
        %899 = vmatprep.subr.mxu0 0.0
        %900 = vmatpush1.msra.mxu0 %v320
        %901 = vmatprep.subr.mxu0 0.0
        %902 = vmatpush1.msra.mxu0 %v319
        %903 = vmatprep.subr.mxu0 0.0
        %904 = vmatpush1.msra.mxu0 %v318
        %905 = vmatprep.subr.mxu0 0.0
        %906 = vmatpush1.msra.mxu0 %v317
        %907 = vmatprep.subr.mxu0 0.0
        %908 = vmatpush1.msra.mxu0 %v316
        %909 = vmatprep.subr.mxu0 0.0
        %910 = vmatpush1.msra.mxu0 %v315
        %911 = vmatprep.subr.mxu0 0.0
        %912 = vmatpush2.msra.mxu0 0.0
        %913 = vmatprep.subr.mxu0 0.0
        %914 = vmatpush2.msra.mxu0 0.0
        %915 = vmatprep.subr.mxu0 0.0
        %916 = vmatpush2.msra.mxu0 0.0
        %917 = vmatprep.subr.mxu0 0.0
        %918 = vmatpush2.msra.mxu0 0.0
        %919 = vmatprep.subr.mxu0 0.0
        %920 = vmatpush2.msra.mxu0 0.0
        %921 = vmatprep.subr.mxu0 0.0
        %922 = vmatpush2.msra.mxu0 0.0
        %923 = vmatprep.subr.mxu0 0.0
        %924 = vmatpush2.msra.mxu0 0.0
        %925 = vmatprep.subr.mxu0 0.0
        %926 = vmatpush2.msra.mxu0 0.0
        %927 = vmatprep.subr.mxu0 0.0
        %928 = vmatpush2.msra.mxu0 0.0
        %929 = vmatprep.subr.mxu0 0.0
        %930 = vmatpush2.msra.mxu0 0.0
        %931 = vmatprep.subr.mxu0 0.0
        %932 = vmatpush2.msra.mxu0 0.0
        %933 = vmatprep.subr.mxu0 0.0
        %934 = vmatpush2.msra.mxu0 0.0
        %935 = vmatprep.subr.mxu0 0.0
        %936 = vmatpush2.msra.mxu0 0.0
        %937 = vmatprep.subr.mxu0 0.0
        %938 = vmatpush2.msra.mxu0 0.0
        %939 = vmatprep.subr.mxu0 0.0
        %940 = vmatpush2.msra.mxu0 0.0
        %941 = vmatprep.subr.mxu0 0.0
        %942 = vmatpush2.msra.mxu0 0.0
        %943 = vmatprep.mubr.f32.mxu0 0.0
        %944 = vmatmul.mubr.f32.gmra.mxu0 %v878
        %v945 = vpop.f32.mrf.mxu0
        %v946 = vadd.f32 0.0, %v945
        %v947 = vpop.f32.mrf.mxu0
        %948 = vdwg.mxu0
        %v949 = vmul.f32 %v878, 0.95
        %v951 = vrot.slane %v946, 2
        %v953 = vadd.f32 %v332, %v951
        %v954 = vmax.f32 %v953, 0.0
        %v956 = vcombine.high %v954, %v954
        %v958 = vunpack.c.l.s4 1966171168
        %v959 = vunpack.c.0.s8 %v958
        %v960 = vlaneseq
        %v961 = vshrl.u32 %v960, 7
        %v962 = vsub.s32 %v959, %v961
        %v963 = vrot.slane %v956, %v962
        %v965 = vunpack.c.l.s4 1966171168
        %v966 = vunpack.c.0.s8 %v965
        %v967 = vlaneseq
        %v968 = vshrl.u32 %v967, 7
        %v969 = vsub.s32 %v966, %v968
        %v970 = vrot.slane %v963, %v969
        %v971 = vcombine.high %v970, %v970
        %v973 = vadd.f32 %v949, %v971
        %974 = vmatprep.subr.mxu0 0.0
        %975 = vmatpush1.msra.mxu0 %v330
        %976 = vmatprep.subr.mxu0 0.0
        %977 = vmatpush1.msra.mxu0 %v329
        %978 = vmatprep.subr.mxu0 0.0
        %979 = vmatpush1.msra.mxu0 %v328
        %980 = vmatprep.subr.mxu0 0.0
        %981 = vmatpush1.msra.mxu0 %v327
        %982 = vmatprep.subr.mxu0 0.0
        %983 = vmatpush1.msra.mxu0 %v326
        %984 = vmatprep.subr.mxu0 0.0
        %985 = vmatpush1.msra.mxu0 %v325
        %986 = vmatprep.subr.mxu0 0.0
        %987 = vmatpush1.msra.mxu0 %v324
        %988 = vmatprep.subr.mxu0 0.0
        %989 = vmatpush1.msra.mxu0 %v323
        %990 = vmatprep.subr.mxu0 0.0
        %991 = vmatpush1.msra.mxu0 %v322
        %992 = vmatprep.subr.mxu0 0.0
        %993 = vmatpush1.msra.mxu0 %v321
        %994 = vmatprep.subr.mxu0 0.0
        %995 = vmatpush1.msra.mxu0 %v320
        %996 = vmatprep.subr.mxu0 0.0
        %997 = vmatpush1.msra.mxu0 %v319
        %998 = vmatprep.subr.mxu0 0.0
        %999 = vmatpush1.msra.mxu0 %v318
        %1000 = vmatprep.subr.mxu0 0.0
        %1001 = vmatpush1.msra.mxu0 %v317
        %1002 = vmatprep.subr.mxu0 0.0
        %1003 = vmatpush1.msra.mxu0 %v316
        %1004 = vmatprep.subr.mxu0 0.0
        %1005 = vmatpush1.msra.mxu0 %v315
        %1006 = vmatprep.subr.mxu0 0.0
        %1007 = vmatpush2.msra.mxu0 0.0
        %1008 = vmatprep.subr.mxu0 0.0
        %1009 = vmatpush2.msra.mxu0 0.0
        %1010 = vmatprep.subr.mxu0 0.0
        %1011 = vmatpush2.msra.mxu0 0.0
        %1012 = vmatprep.subr.mxu0 0.0
        %1013 = vmatpush2.msra.mxu0 0.0
        %1014 = vmatprep.subr.mxu0 0.0
        %1015 = vmatpush2.msra.mxu0 0.0
        %1016 = vmatprep.subr.mxu0 0.0
        %1017 = vmatpush2.msra.mxu0 0.0
        %1018 = vmatprep.subr.mxu0 0.0
        %1019 = vmatpush2.msra.mxu0 0.0
        %1020 = vmatprep.subr.mxu0 0.0
        %1021 = vmatpush2.msra.mxu0 0.0
        %1022 = vmatprep.subr.mxu0 0.0
        %1023 = vmatpush2.msra.mxu0 0.0
        %1024 = vmatprep.subr.mxu0 0.0
        %1025 = vmatpush2.msra.mxu0 0.0
        %1026 = vmatprep.subr.mxu0 0.0
        %1027 = vmatpush2.msra.mxu0 0.0
        %1028 = vmatprep.subr.mxu0 0.0
        %1029 = vmatpush2.msra.mxu0 0.0
        %1030 = vmatprep.subr.mxu0 0.0
        %1031 = vmatpush2.msra.mxu0 0.0
        %1032 = vmatprep.subr.mxu0 0.0
        %1033 = vmatpush2.msra.mxu0 0.0
        %1034 = vmatprep.subr.mxu0 0.0
        %1035 = vmatpush2.msra.mxu0 0.0
        %1036 = vmatprep.subr.mxu0 0.0
        %1037 = vmatpush2.msra.mxu0 0.0
        %1038 = vmatprep.mubr.f32.mxu0 0.0
        %1039 = vmatmul.mubr.f32.gmra.mxu0 %v973
        %v1040 = vpop.f32.mrf.mxu0
        %v1041 = vadd.f32 0.0, %v1040
        %v1042 = vpop.f32.mrf.mxu0
        %1043 = vdwg.mxu0
        %v1044 = vmul.f32 %v973, 0.95
        %v1046 = vrot.slane %v1041, 1
        %v1048 = vadd.f32 %v332, %v1046
        %v1049 = vmax.f32 %v1048, 0.0
        %v1051 = vcombine.high %v1049, %v1049
        %v1053 = vunpack.c.l.s4 1966171168
        %v1054 = vunpack.c.0.s8 %v1053
        %v1055 = vlaneseq
        %v1056 = vshrl.u32 %v1055, 7
        %v1057 = vsub.s32 %v1054, %v1056
        %v1058 = vrot.slane %v1051, %v1057
        %v1059 = vcombine.high %v1058, %v1058
        %v1061 = vunpack.c.l.s4 1966171168
        %v1062 = vunpack.c.0.s8 %v1061
        %v1063 = vlaneseq
        %v1064 = vshrl.u32 %v1063, 7
        %v1065 = vsub.s32 %v1062, %v1064
        %v1066 = vrot.slane %v1059, %v1065
        %v1067 = vcombine.high %v1066, %v1066
        %v1069 = vadd.f32 %v1044, %v1067
        %v1071 = vlaneseq
        %v1072 = vshrl.u32 %v1071, 7
        %v1073 = vsub.s32 0, %v1072
        %v1074 = vrot.slane %v500, %v1073
        %v1077 = vlaneseq
        %v1078 = vshrl.u32 %v1077, 7
        %v1079 = vsub.s32 0, %v1078
        %v1080 = vrot.slane %v594, %v1079
        %v1083 = vlaneseq
        %v1084 = vshrl.u32 %v1083, 7
        %v1085 = vsub.s32 0, %v1084
        %v1086 = vrot.slane %v689, %v1085
        %v1089 = vlaneseq
        %v1090 = vshrl.u32 %v1089, 7
        %v1091 = vsub.s32 0, %v1090
        %v1092 = vrot.slane %v783, %v1091
        %v1095 = vlaneseq
        %v1096 = vshrl.u32 %v1095, 7
        %v1097 = vsub.s32 0, %v1096
        %v1098 = vrot.slane %v878, %v1097
        %v1101 = vlaneseq
        %v1102 = vshrl.u32 %v1101, 7
        %v1103 = vsub.s32 0, %v1102
        %v1104 = vrot.slane %v973, %v1103
        %v1107 = vlaneseq
        %v1108 = vshrl.u32 %v1107, 7
        %v1109 = vsub.s32 0, %v1108
        %v1110 = vrot.slane %v1069, %v1109
        %vm1112 = vcmask 1040384
        %v1113 = vsel %vm1112, %v406, %v1074
        %vm1114 = vcmask 1041408
        %v1115 = vsel %vm1114, %v1113, %v1080
        %vm1116 = vcmask 1042432
        %v1117 = vsel %vm1116, %v1115, %v1086
        %vm1118 = vcmask 1043456
        %v1119 = vsel %vm1118, %v1117, %v1092
        %vm1120 = vcmask 1044480
        %v1121 = vsel %vm1120, %v1119, %v1098
        %vm1122 = vcmask 1045504
        %v1123 = vsel %vm1122, %v1121, %v1104
        %vm1124 = vcmask 1046528
        %v1125 = vsel %vm1124, %v1123, %v1110
        %1126 = vst [vmem:[%s257] sm:$0xff] %v1125
        %1127 = vst [vmem:[#allocation2] sm:$0x1] %v1069
        %s1128 = sand.u32 %s160, 1
        %s1129 = scalar_lea.sflag [#allocation6], %s1128
        %s1130 = sand.u32 %s160, 1
        %s1131 = smul.addr %s1130, 8
        %s1132 = scalar_lea.vmem [#allocation7], %s1131
        // Predicated region
        $region53: #{tpu_custom_call.1} parent=43 // pred_check
          %p1133 = pneg %p170
        $region54: #{tpu_custom_call.1} parent=43 // pred_check_branch
          %1135 = sbr.rel (%p1133) target = $region56
        $region55: #{tpu_custom_call.1} parent=43 // pred_region
          %s1137 = ssub.s32 128, 128
          %1138 = vsyncadd %s1129, %s1137
          %s1139 = smul.addr %s21, 128
          %s1140 = scalar_lea.hbm %s6, %s1139
          %s1142 = sshll.u32 %s1132, 4
          %s1143 = int_to_ptr.vmem [resolvable:$true] %s1142
          %1145 = dma.vmem_to_hbm [thread:$0]  %s1143, 128, %s1140, %s1129
        $region56: #{tpu_custom_call.1} parent=43 // pred_fallthru
          _
      $region44: #{tpu_custom_call.1} parent=5 // pred_fallthru
        _
      %p1146 = scmp.le.s32.totalorder 2, %s16
      // Predicated region
      $region57: #{tpu_custom_call.1} parent=5 // pred_check
        %p1147 = pneg %p1146
      $region58: #{tpu_custom_call.1} parent=5 // pred_check_branch
        %1149 = sbr.rel (%p1147) target = $region60
      $region59: #{tpu_custom_call.1} parent=5 // pred_region
        %s1150 = ssub.s32 %s16, 2
        // Predicated region
        $region61: #{tpu_custom_call.1} parent=59 // pred_check
          %p1151 = pneg %p176
        $region62: #{tpu_custom_call.1} parent=59 // pred_check_branch
          %1153 = sbr.rel (%p1151) target = $region64
        $region63: #{tpu_custom_call.1} parent=59 // pred_region
          %s1154 = sand.u32 %s161, 1
          %s1155 = scalar_lea.sflag [#allocation6], %s1154
          %s1156 = sand.u32 %s161, 1
          %s1157 = smul.addr %s1156, 8
          %s1158 = scalar_lea.vmem [#allocation7], %s1157
          %1159 = dma.done %s1155, 128
        $region64: #{tpu_custom_call.1} parent=59 // pred_fallthru
          _
      $region60: #{tpu_custom_call.1} parent=5 // pred_fallthru
        _
    $region6: #{tpu_custom_call.1} parent=1 // loop_footer
      %s20 = sadd.s32 1, %s16
    $region7: #{tpu_custom_call.1} parent=1 // loop_footer_branch
      %15 = sbr.rel target = $region3
    $region8: #{tpu_custom_call.1} parent=1 // loop_exit
      _
    %1160 = vsyncpa [#allocation5], 1
    %s1161 = scalar_lea.sflag [#allocation5], 1
    %1162 = vsyncpa %s1161, 1
    %1163 = vsyncpa [#allocation6], 1
    %s1164 = scalar_lea.sflag [#allocation6], 1
    %1165 = vsyncpa %s1164, 1

</llo_original>
